<compile_context>
chip_gen: v7x
topology: tpu7x:2x2x1
jax: 0.10.0
libtpu: 0.0.40
codegen_flags: <defaults>
</compile_context>

<pallas_src>
import math
import jax
import jax.numpy as jnp
from jax.experimental import pallas as pl
from jax.experimental.pallas import tpu as pltpu


def _make_circle_kernel(s: float, m: float):
    """Kernel body with scale s and margin m baked in as constants."""

    def kernel(feat_ref, inv_f_ref, w_ref, inv_w_ref, tgt_ref, out_ref):
        # Raw (unnormalized) similarity tile on the MXU, f32 accumulation.
        raw = jax.lax.dot_general(
            feat_ref[...], w_ref[...],
            dimension_numbers=(((1,), (1,)), ((), ())),
            preferred_element_type=jnp.float32,
        )                                              # (TB, TC) f32

        # Scale by precomputed inverse L2 norms -> cosine similarity.
        sim = raw * inv_f_ref[...] * inv_w_ref[...]    # (TB,1) and (1,TC) broadcast

        alpha_p = jnp.maximum((1.0 + m) - sim, 0.0)    # relu(-sim + 1 + m)
        alpha_n = jnp.maximum(sim + m, 0.0)            # relu(sim + m)

        # one_hot.scatter_(1, targets, 1) == (global class index == target),
        # offset by this C-tile's starting column.
        tc = out_ref.shape[1]
        col0 = pl.program_id(0) * tc
        classes = col0 + jax.lax.broadcasted_iota(jnp.int32, sim.shape, 1)
        is_tgt = classes == tgt_ref[...]               # (TB,TC) vs (TB,1)

        out_ref[...] = s * jnp.where(
            is_tgt,
            alpha_p * (sim - (1.0 - m)),               # s_p / s
            alpha_n * (sim - m),                       # s_n / s
        )

    return kernel


def _pick_tile(dim, desired, align):
    """Largest t <= desired with t % align == 0 and dim % t == 0, else full dim."""
    if dim <= desired:
        return dim
    t = (desired // align) * align
    while t >= align:
        if dim % t == 0:
            return t
        t -= align
    return dim


def circle_classifier_forward(bn_feat, weight, targets, *, s=256.0, m=0.25,
                              tb=256, tc=512, compute_dtype=jnp.bfloat16,
                              vmem_limit_bytes=None):
    """bn_feat: (B, D), weight: (C, D), targets: (B,) int -> (B, C) f32 logits."""
    B, D = bn_feat.shape
    C, D2 = weight.shape
    assert D == D2, "in_features mismatch"

    feat32 = bn_feat.astype(jnp.float32)
    w32 = weight.astype(jnp.float32)
    # F.normalize: x / max(||x||, 1e-12)  ==  x * rsqrt(max(||x||^2, 1e-24))
    inv_f = jax.lax.rsqrt(
        jnp.maximum(jnp.sum(feat32 * feat32, axis=1, keepdims=True), 1e-24))   # (B, 1)
    inv_w = jax.lax.rsqrt(
        jnp.maximum(jnp.sum(w32 * w32, axis=1, keepdims=True), 1e-24)
    ).reshape(1, C)                                                            # (1, C)

    feat_in = bn_feat.astype(compute_dtype)   # MXU operands (bf16 by default)
    w_in = weight.astype(compute_dtype)
    tgt2d = targets.astype(jnp.int32).reshape(B, 1)

    TB = _pick_tile(B, tb, 8)      # second-to-last dims: multiple of 8 (or full)
    TC = _pick_tile(C, tc, 128)    # output lane dim: multiple of 128 (or full)
    grid = (C // TC, B // TB)      # B innermost -> weight tile resident across B

    kernel = _make_circle_kernel(float(s), float(m))

    itemsize = jnp.dtype(compute_dtype).itemsize
    cost = pl.CostEstimate(
        flops=2 * B * C * D,
        transcendentals=0,
        bytes_accessed=(B * D + C * D) * itemsize + 4 * (B + C + 2 * B + B * C),
    )

    return pl.pallas_call(
        kernel,
        out_shape=jax.ShapeDtypeStruct((B, C), jnp.float32),
        grid_spec=pltpu.PrefetchScalarGridSpec(
            num_scalar_prefetch=0,
            grid=grid,
            in_specs=[
                pl.BlockSpec((TB, D), lambda c, b: (b, 0)),   # features
                pl.BlockSpec((TB, 1), lambda c, b: (b, 0)),   # inv feature norms
                pl.BlockSpec((TC, D), lambda c, b: (c, 0)),   # weights (reused over b)
                pl.BlockSpec((1, TC), lambda c, b: (0, c)),   # inv weight norms
                pl.BlockSpec((TB, 1), lambda c, b: (b, 0)),   # targets
            ],
            out_specs=pl.BlockSpec((TB, TC), lambda c, b: (b, c)),
        ),
        compiler_params=pltpu.CompilerParams(
            dimension_semantics=("parallel", "parallel"),
            vmem_limit_bytes=vmem_limit_bytes,
        ),
        cost_estimate=cost,
    )(feat_in, inv_f, w_in, inv_w, tgt2d)


def reference_forward(bn_feat, weight, targets, *, s=256.0, m=0.25):
    """Pure-JAX reference mirroring the PyTorch forward (f32 throughout)."""
    def l2n(x):
        n = jnp.sqrt(jnp.sum(x * x, axis=1, keepdims=True))
        return x / jnp.maximum(n, 1e-12)
    sim = l2n(bn_feat) @ l2n(weight).T
    alpha_p = jax.nn.relu(-sim + 1 + m)
    alpha_n = jax.nn.relu(sim + m)
    s_p = s * alpha_p * (sim - (1 - m))
    s_n = s * alpha_n * (sim - m)
    one_hot = jax.nn.one_hot(targets, weight.shape[0], dtype=jnp.float32)
    return one_hot * s_p + (1.0 - one_hot) * s_n


if __name__ == "__main__":
    # Small shapes that still exercise the 2-D (C, B) tiling and the iota offset:
    # grid = (C//TC, B//TB) = (2, 2) with TB=32, TC=256.
    B, D, C = 64, 128, 512
    S, M = 256.0, 0.25

    key = jax.random.PRNGKey(0)
    k_feat, k_w, k_tgt = jax.random.split(key, 3)

    bn_feat = jax.random.normal(k_feat, (B, D), dtype=jnp.float32)

    # Deterministic kaiming_uniform_(a=sqrt(5)): bound = 1/sqrt(fan_in)
    bound = 1.0 / math.sqrt(D)
    weight = jax.random.uniform(k_w, (C, D), dtype=jnp.float32,
                                minval=-bound, maxval=bound)
    targets = jax.random.randint(k_tgt, (B,), 0, C, dtype=jnp.int32)

    ref = reference_forward(bn_feat, weight, targets, s=S, m=M)

    # f32 MXU path: tight parity with the PyTorch-equivalent reference.
    out_f32 = circle_classifier_forward(bn_feat, weight, targets, s=S, m=M,
                                        tb=32, tc=256,
                                        compute_dtype=jnp.float32)
    out_f32 = jax.block_until_ready(out_f32)
    assert out_f32.shape == (B, C)
    assert jnp.allclose(out_f32, ref, atol=2e-3, rtol=2e-3), "f32 mismatch vs reference"

    # bf16 MXU path (f32 accumulate): fast default, loose sanity check
    # (bf16 operand rounding * s=256 dominates the tolerance).
    out_bf16 = circle_classifier_forward(bn_feat, weight, targets, s=S, m=M,
                                         tb=32, tc=256,
                                         compute_dtype=jnp.bfloat16)
    out_bf16 = jax.block_until_ready(out_bf16)
    assert out_bf16.shape == (B, C)
    assert jnp.allclose(out_bf16, ref, atol=8.0, rtol=5e-2), "bf16 path diverged"

    print("KERNEL_OK")
</pallas_src>

<mosaic_0001>
module attributes {stable_mosaic.version = 11 : i64} {
  func.func @kernel(%arg0: i32, %arg1: i32, %arg2: memref<32x128xf32, #tpu.memory_space<vmem>>, %arg3: memref<32x1xf32, #tpu.memory_space<vmem>>, %arg4: memref<256x128xf32, #tpu.memory_space<vmem>>, %arg5: memref<1x256xf32, #tpu.memory_space<vmem>>, %arg6: memref<32x1xi32, #tpu.memory_space<vmem>>, %arg7: memref<32x256xf32, #tpu.memory_space<vmem>>) attributes {dimension_semantics = [#tpu.dimension_semantics<parallel>, #tpu.dimension_semantics<parallel>], iteration_bounds = array<i64: 2, 2>, scalar_prefetch = 0 : i64, scratch_operands = 0 : i64, tpu.core_type = #tpu.core_type<tc>, window_params = [{transform_indices = @transform_0, window_bounds = array<i64: 32, 128>}, {transform_indices = @transform_1, window_bounds = array<i64: 32, 1>}, {transform_indices = @transform_2, window_bounds = array<i64: 256, 128>}, {transform_indices = @transform_3, window_bounds = array<i64: 1, 256>}, {transform_indices = @transform_4, window_bounds = array<i64: 32, 1>}, {transform_indices = @transform_5, window_bounds = array<i64: 32, 256>}]} {
    %c0 = arith.constant 0 : index
    %c0_0 = arith.constant 0 : index
    %0 = vector.load %arg2[%c0, %c0_0] : memref<32x128xf32, #tpu.memory_space<vmem>>, vector<32x128xf32>
    %c0_1 = arith.constant 0 : index
    %c0_2 = arith.constant 0 : index
    %1 = vector.load %arg4[%c0_1, %c0_2] : memref<256x128xf32, #tpu.memory_space<vmem>>, vector<256x128xf32>
    %cst = arith.constant dense<0.000000e+00> : vector<32x256xf32>
    %2 = tpu.matmul %0, %1, %cst {dimension_numbers = #tpu.dot_dimension_numbers<[1], [1], [0], [0], [0, 0, 1, 0], [], []>} : vector<32x128xf32>, vector<256x128xf32>, vector<32x256xf32> -> vector<32x256xf32>
    %c0_3 = arith.constant 0 : index
    %c0_4 = arith.constant 0 : index
    %3 = vector.load %arg3[%c0_3, %c0_4] : memref<32x1xf32, #tpu.memory_space<vmem>>, vector<32x1xf32>
    %4 = vector.broadcast %3 : vector<32x1xf32> to vector<32x256xf32>
    %5 = arith.mulf %2, %4 : vector<32x256xf32>
    %c0_5 = arith.constant 0 : index
    %c0_6 = arith.constant 0 : index
    %6 = vector.load %arg5[%c0_5, %c0_6] : memref<1x256xf32, #tpu.memory_space<vmem>>, vector<1x256xf32>
    %7 = vector.broadcast %6 : vector<1x256xf32> to vector<32x256xf32>
    %8 = arith.mulf %5, %7 : vector<32x256xf32>
    %cst_7 = arith.constant 1.250000e+00 : f32
    %9 = vector.broadcast %cst_7 : f32 to vector<32x256xf32>
    %10 = arith.subf %9, %8 : vector<32x256xf32>
    %cst_8 = arith.constant 0.000000e+00 : f32
    %11 = vector.broadcast %cst_8 : f32 to vector<32x256xf32>
    %12 = arith.maximumf %10, %11 : vector<32x256xf32>
    %cst_9 = arith.constant 2.500000e-01 : f32
    %13 = vector.broadcast %cst_9 : f32 to vector<32x256xf32>
    %14 = arith.addf %8, %13 : vector<32x256xf32>
    %cst_10 = arith.constant 0.000000e+00 : f32
    %15 = vector.broadcast %cst_10 : f32 to vector<32x256xf32>
    %16 = arith.maximumf %14, %15 : vector<32x256xf32>
    %c256_i32 = arith.constant 256 : i32
    %17 = arith.muli %arg0, %c256_i32 : i32
    %18 = tpu.iota {dimensions = array<i32: 1>} : vector<32x256xi32>
    %19 = vector.broadcast %17 : i32 to vector<32x256xi32>
    %20 = arith.addi %19, %18 : vector<32x256xi32>
    %c0_11 = arith.constant 0 : index
    %c0_12 = arith.constant 0 : index
    %21 = vector.load %arg6[%c0_11, %c0_12] : memref<32x1xi32, #tpu.memory_space<vmem>>, vector<32x1xi32>
    %22 = vector.broadcast %21 : vector<32x1xi32> to vector<32x256xi32>
    %23 = arith.cmpi eq, %20, %22 : vector<32x256xi32>
    %cst_13 = arith.constant 7.500000e-01 : f32
    %24 = vector.broadcast %cst_13 : f32 to vector<32x256xf32>
    %25 = arith.subf %8, %24 : vector<32x256xf32>
    %26 = arith.mulf %12, %25 : vector<32x256xf32>
    %cst_14 = arith.constant 2.500000e-01 : f32
    %27 = vector.broadcast %cst_14 : f32 to vector<32x256xf32>
    %28 = arith.subf %8, %27 : vector<32x256xf32>
    %29 = arith.mulf %16, %28 : vector<32x256xf32>
    %30 = arith.select %23, %26, %29 : vector<32x256xi1>, vector<32x256xf32>
    %cst_15 = arith.constant 2.560000e+02 : f32
    %31 = vector.broadcast %cst_15 : f32 to vector<32x256xf32>
    %32 = arith.mulf %31, %30 : vector<32x256xf32>
    %c0_16 = arith.constant 0 : index
    %c0_17 = arith.constant 0 : index
    %33 = vector.load %arg7[%c0_16, %c0_17] : memref<32x256xf32, #tpu.memory_space<vmem>>, vector<32x256xf32>
    tpu.vector_store %arg7[%c0_16, %c0_17], %32 {strides = array<i32>} : memref<32x256xf32, #tpu.memory_space<vmem>>, vector<32x256xf32>,
    return
  }
  func.func @transform_0(%arg0: i32, %arg1: i32) -> (i32, i32) {
    %c0_i32 = arith.constant 0 : i32
    %c0_i32_0 = arith.constant 0 : i32
    return %arg1, %c0_i32 : i32, i32
  }
  func.func @transform_1(%arg0: i32, %arg1: i32) -> (i32, i32) {
    %c0_i32 = arith.constant 0 : i32
    %c0_i32_0 = arith.constant 0 : i32
    return %arg1, %c0_i32 : i32, i32
  }
  func.func @transform_2(%arg0: i32, %arg1: i32) -> (i32, i32) {
    %c0_i32 = arith.constant 0 : i32
    %c0_i32_0 = arith.constant 0 : i32
    return %arg0, %c0_i32 : i32, i32
  }
  func.func @transform_3(%arg0: i32, %arg1: i32) -> (i32, i32) {
    %c0_i32 = arith.constant 0 : i32
    %c0_i32_0 = arith.constant 0 : i32
    return %c0_i32, %arg0 : i32, i32
  }
  func.func @transform_4(%arg0: i32, %arg1: i32) -> (i32, i32) {
    %c0_i32 = arith.constant 0 : i32
    %c0_i32_0 = arith.constant 0 : i32
    return %arg1, %c0_i32 : i32, i32
  }
  func.func @transform_5(%arg0: i32, %arg1: i32) -> (i32, i32) {
    %c0_i32 = arith.constant 0 : i32
    return %arg1, %arg0 : i32, i32
  }
}

</mosaic_0001>

<llo_original>
// kernel: tpu_custom_call.1
$region0: #{tpu_custom_call.1}
  #allocation0 [shape = 'u32[]', space=smem, size = 0x4, offset = 0x4, fixed_abs, tag = 'smem constant byte address 0x4 - core index']
  #allocation1 [shape = 'u32[144,128]{1,0:T(1,128)}', space=vmem, size = 0x12000, scoped, tag = 'internal scratch']
  %s0 = inlined_call_operand.vmem [shape: f32[64,128], index: 0, kind: input, shape index: {}]
  %s1 = inlined_call_operand.vmem [shape: f32[64,1], index: 1, kind: input, shape index: {}]
  %s2 = inlined_call_operand.hbm [shape: f32[512,128], index: 2, kind: input, shape index: {}]
  %s3 = inlined_call_operand.vmem [shape: f32[1,512], index: 3, kind: input, shape index: {}]
  %s4 = inlined_call_operand.vmem [shape: s32[64,1], index: 4, kind: input, shape index: {}]
  %s5 = inlined_call_operand.hbm [shape: f32[64,512], index: 5, kind: output, shape index: {}]
  %s6 = sld [smem:[#allocation0]]
  $region57: #{tpu_custom_call.1} parent=0
    _
  %s8 = ssub.s32 1, %s6
  %s9 = scalar_select 0, %s8, %s6
  $region1: #{tpu_custom_call.1} parent=0
    #allocation2 [shape = 'u8[262144]{0}', space=vmem, size = 0x40000, scoped, tag = 'input window, operand 2']
    #allocation3 [shape = 's32[2]{0}', space=sflag, size = 0x8, scoped, tag = 'scoped memory for tpu_custom_call.1']
    #allocation4 [shape = 's32[2]{0}', space=sflag, size = 0x8, scoped, tag = 'scoped memory for tpu_custom_call.1']
    #allocation5 [shape = 'u8[65536]{0}', space=vmem, size = 0x10000, scoped, tag = 'output window, operand 0']
    %10 = vsyncpa [#allocation3], 0
    %s11 = scalar_lea.sflag [#allocation3], 1
    %12 = vsyncpa %s11, 0
    %13 = vsyncpa [#allocation4], 0
    %s14 = scalar_lea.sflag [#allocation4], 1
    %15 = vsyncpa %s14, 0
    loop: start=0, step=1, limit=6
    $region2: #{tpu_custom_call.1} parent=1 // loop_pre_header
      _
    $region3: #{tpu_custom_call.1} parent=1 // loop_header
      %s17 = sphi 0, %s21
      %p18 = scmp.ge.s32.totalorder %s17, 6
      %s24 = sphi 0, %s36
      %s25 = sphi 0, %s32
      %s26 = sphi 0, %s24
      %s27 = sphi 0, %s25
      %s28 = sphi 0, %s26
      %s29 = sphi 0, %s27
      %s39 = sphi 0, %s41
      %s42 = sphi 0, %s39
      %s43 = sphi 0, %s42
      %s59 = sphi 0, %s43
      %s65 = sphi 0, %s67
      %s68 = sphi 0, %s65
      %s69 = sphi 0, %s68
      %s85 = sphi 0, %s69
      %s91 = sphi 0, %s93
      %s94 = sphi 0, %s91
      %s95 = sphi 0, %s94
      %s111 = sphi 0, %s95
      %s117 = sphi 0, %s119
      %s120 = sphi 0, %s117
      %s121 = sphi 0, %s120
      %s137 = sphi 0, %s121
      %s143 = sphi 0, %s145
      %s146 = sphi 0, %s143
      %s147 = sphi 0, %s146
      %s163 = sphi 0, %s147
      %s171 = sphi 0, %s173
      %s174 = sphi 0, %s171
      %s175 = sphi 0, %s174
      %s191 = sphi 0, %s175
    $region4: #{tpu_custom_call.1} parent=1 // loop_header_branch
      %20 = sbr.rel (%p18) target = $region8
    $region5: #{tpu_custom_call.1} parent=1 // loop_body
      %s22 = ssub.s32 %s17, 1
      %s23 = ssub.s32 %s17, 2
      %s30 = sadd.s32 1, %s25
      %p31 = scmp.ge.s32.totalorder %s30, 2
      %s32 = scalar_select %p31, 0, %s30
      %s33 = sadd.s32 1, %s24
      %s34 = scalar_select %p31, %s33, %s24
      %p35 = scmp.ge.s32.totalorder %s34, 2
      %s36 = scalar_select %p35, 0, %s34
      %s37 = ssub.s32 %s25, %s32
      %p38 = scmp.eq.s32.totalorder %s37, 0
      %s40 = sadd.s32 %s39, 1
      %s41 = scalar_select %p38, %s39, %s40
      %p44 = pneg %p38
      %p45 = scmp.eq.s32.totalorder %s17, 3
      %p46 = por %p44, %p45
      %p47 = scmp.ne.s32.totalorder %s39, %s42
      %p48 = scmp.eq.s32.totalorder %s17, 0
      %p49 = por %p47, %p48
      %p50 = scmp.ne.s32.totalorder %s39, %s42
      %p51 = scmp.eq.s32.totalorder %s22, 3
      %p52 = por %p50, %p51
      %p53 = scmp.ne.s32.totalorder %s42, %s43
      %p54 = scmp.eq.s32.totalorder %s22, 0
      %p55 = por %p53, %p54
      %p56 = scmp.ne.s32.totalorder %s42, %s43
      %p57 = scmp.eq.s32.totalorder %s23, 3
      %p58 = por %p56, %p57
      %p60 = scmp.ne.s32.totalorder %s43, %s59
      %p61 = scmp.eq.s32.totalorder %s23, 0
      %p62 = por %p60, %p61
      %s63 = ssub.s32 %s25, %s32
      %p64 = scmp.eq.s32.totalorder %s63, 0
      %s66 = sadd.s32 %s65, 1
      %s67 = scalar_select %p64, %s65, %s66
      %p70 = pneg %p64
      %p71 = scmp.eq.s32.totalorder %s17, 3
      %p72 = por %p70, %p71
      %p73 = scmp.ne.s32.totalorder %s65, %s68
      %p74 = scmp.eq.s32.totalorder %s17, 0
      %p75 = por %p73, %p74
      %p76 = scmp.ne.s32.totalorder %s65, %s68
      %p77 = scmp.eq.s32.totalorder %s22, 3
      %p78 = por %p76, %p77
      %p79 = scmp.ne.s32.totalorder %s68, %s69
      %p80 = scmp.eq.s32.totalorder %s22, 0
      %p81 = por %p79, %p80
      %p82 = scmp.ne.s32.totalorder %s68, %s69
      %p83 = scmp.eq.s32.totalorder %s23, 3
      %p84 = por %p82, %p83
      %p86 = scmp.ne.s32.totalorder %s69, %s85
      %p87 = scmp.eq.s32.totalorder %s23, 0
      %p88 = por %p86, %p87
      %s89 = ssub.s32 %s24, %s36
      %p90 = scmp.eq.s32.totalorder %s89, 0
      %s92 = sadd.s32 %s91, 1
      %s93 = scalar_select %p90, %s91, %s92
      %p96 = pneg %p90
      %p97 = scmp.eq.s32.totalorder %s17, 3
      %p98 = por %p96, %p97
      %p99 = scmp.ne.s32.totalorder %s91, %s94
      %p100 = scmp.eq.s32.totalorder %s17, 0
      %p101 = por %p99, %p100
      %p102 = scmp.ne.s32.totalorder %s91, %s94
      %p103 = scmp.eq.s32.totalorder %s22, 3
      %p104 = por %p102, %p103
      %p105 = scmp.ne.s32.totalorder %s94, %s95
      %p106 = scmp.eq.s32.totalorder %s22, 0
      %p107 = por %p105, %p106
      %p108 = scmp.ne.s32.totalorder %s94, %s95
      %p109 = scmp.eq.s32.totalorder %s23, 3
      %p110 = por %p108, %p109
      %p112 = scmp.ne.s32.totalorder %s95, %s111
      %p113 = scmp.eq.s32.totalorder %s23, 0
      %p114 = por %p112, %p113
      %s115 = ssub.s32 %s24, %s36
      %p116 = scmp.eq.s32.totalorder %s115, 0
      %s118 = sadd.s32 %s117, 1
      %s119 = scalar_select %p116, %s117, %s118
      %p122 = pneg %p116
      %p123 = scmp.eq.s32.totalorder %s17, 3
      %p124 = por %p122, %p123
      %p125 = scmp.ne.s32.totalorder %s117, %s120
      %p126 = scmp.eq.s32.totalorder %s17, 0
      %p127 = por %p125, %p126
      %p128 = scmp.ne.s32.totalorder %s117, %s120
      %p129 = scmp.eq.s32.totalorder %s22, 3
      %p130 = por %p128, %p129
      %p131 = scmp.ne.s32.totalorder %s120, %s121
      %p132 = scmp.eq.s32.totalorder %s22, 0
      %p133 = por %p131, %p132
      %p134 = scmp.ne.s32.totalorder %s120, %s121
      %p135 = scmp.eq.s32.totalorder %s23, 3
      %p136 = por %p134, %p135
      %p138 = scmp.ne.s32.totalorder %s121, %s137
      %p139 = scmp.eq.s32.totalorder %s23, 0
      %p140 = por %p138, %p139
      %s141 = ssub.s32 %s25, %s32
      %p142 = scmp.eq.s32.totalorder %s141, 0
      %s144 = sadd.s32 %s143, 1
      %s145 = scalar_select %p142, %s143, %s144
      %p148 = pneg %p142
      %p149 = scmp.eq.s32.totalorder %s17, 3
      %p150 = por %p148, %p149
      %p151 = scmp.ne.s32.totalorder %s143, %s146
      %p152 = scmp.eq.s32.totalorder %s17, 0
      %p153 = por %p151, %p152
      %p154 = scmp.ne.s32.totalorder %s143, %s146
      %p155 = scmp.eq.s32.totalorder %s22, 3
      %p156 = por %p154, %p155
      %p157 = scmp.ne.s32.totalorder %s146, %s147
      %p158 = scmp.eq.s32.totalorder %s22, 0
      %p159 = por %p157, %p158
      %p160 = scmp.ne.s32.totalorder %s146, %s147
      %p161 = scmp.eq.s32.totalorder %s23, 3
      %p162 = por %p160, %p161
      %p164 = scmp.ne.s32.totalorder %s147, %s163
      %p165 = scmp.eq.s32.totalorder %s23, 0
      %p166 = por %p164, %p165
      %s167 = ssub.s32 %s25, %s32
      %s168 = ssub.s32 %s24, %s36
      %s169 = sor.u32 %s167, %s168
      %p170 = scmp.eq.s32.totalorder %s169, 0
      %s172 = sadd.s32 %s171, 1
      %s173 = scalar_select %p170, %s171, %s172
      %p176 = pneg %p170
      %p177 = scmp.eq.s32.totalorder %s17, 3
      %p178 = por %p176, %p177
      %p179 = scmp.ne.s32.totalorder %s171, %s174
      %p180 = scmp.eq.s32.totalorder %s17, 0
      %p181 = por %p179, %p180
      %p182 = scmp.ne.s32.totalorder %s171, %s174
      %p183 = scmp.eq.s32.totalorder %s22, 3
      %p184 = por %p182, %p183
      %p185 = scmp.ne.s32.totalorder %s174, %s175
      %p186 = scmp.eq.s32.totalorder %s22, 0
      %p187 = por %p185, %p186
      %p188 = scmp.ne.s32.totalorder %s174, %s175
      %p189 = scmp.eq.s32.totalorder %s23, 3
      %p190 = por %p188, %p189
      %p192 = scmp.ne.s32.totalorder %s175, %s191
      %p193 = scmp.eq.s32.totalorder %s23, 0
      %p194 = por %p192, %p193
      %p195 = scmp.le.s32.totalorder 1, %s17
      %p196 = scmp.lt.s32.totalorder %s17, 5
      %p197 = pnand %p195, %p196
      %p198 = pneg %p197
      // Predicated region
      $region9: #{tpu_custom_call.1} parent=5 // pred_check
        _
      $region10: #{tpu_custom_call.1} parent=5 // pred_check_branch
        %200 = sbr.rel (%p197) target = $region12
      $region11: #{tpu_custom_call.1} parent=5 // pred_region
        %s201 = ssub.s32 %s17, 1
      $region12: #{tpu_custom_call.1} parent=5 // pred_fallthru
        _
      %p202 = scmp.lt.s32.totalorder %s17, 4
      // Predicated region
      $region13: #{tpu_custom_call.1} parent=5 // pred_check
        %p203 = pneg %p202
      $region14: #{tpu_custom_call.1} parent=5 // pred_check_branch
        %205 = sbr.rel (%p203) target = $region16
      $region15: #{tpu_custom_call.1} parent=5 // pred_region
        // Predicated region
        $region17: #{tpu_custom_call.1} parent=15 // pred_check
          %p206 = pneg %p49
        $region18: #{tpu_custom_call.1} parent=15 // pred_check_branch
          %208 = sbr.rel (%p206) target = $region20
        $region19: #{tpu_custom_call.1} parent=15 // pred_region
          %s209 = smul.u32 4, %s25
          %p210 = scmp.lt.s32.totalorder %s209, 7
          %s211 = scalar_select %p210, %s209, 7
          %s212 = smul.addr %s211, 8
          %s213 = scalar_lea.vmem %s0, %s212
          %s214 = smul.u32 4, %s25
        $region20: #{tpu_custom_call.1} parent=15 // pred_fallthru
          _
        // Predicated region
        $region21: #{tpu_custom_call.1} parent=15 // pred_check
          %p215 = pneg %p75
        $region22: #{tpu_custom_call.1} parent=15 // pred_check_branch
          %217 = sbr.rel (%p215) target = $region24
        $region23: #{tpu_custom_call.1} parent=15 // pred_region
          %s218 = smul.u32 4, %s25
          %p219 = scmp.lt.s32.totalorder %s218, 7
          %s220 = scalar_select %p219, %s218, 7
          %s221 = smul.addr %s220, 8
          %s222 = scalar_lea.vmem %s1, %s221
          %s223 = smul.u32 4, %s25
        $region24: #{tpu_custom_call.1} parent=15 // pred_fallthru
          _
        // Predicated region
        $region25: #{tpu_custom_call.1} parent=15 // pred_check
          %p224 = pneg %p101
        $region26: #{tpu_custom_call.1} parent=15 // pred_check_branch
          %226 = sbr.rel (%p224) target = $region28
        $region27: #{tpu_custom_call.1} parent=15 // pred_region
          %s227 = sand.u32 %s91, 1
          %s228 = scalar_lea.sflag [#allocation3], %s227
          %s229 = sand.u32 %s91, 1
          %s230 = smul.addr %s229, 256
          %s231 = scalar_lea.vmem [#allocation2], %s230
          %s232 = smul.u32 32, %s24
          %s234 = ssub.s32 4096, 4096
          %235 = vsyncadd %s228, %s234
          %s236 = smul.addr %s232, 128
          %s237 = scalar_lea.hbm %s2, %s236
          %s238 = sshll.u32 %s231, 4
          %s239 = int_to_ptr.vmem [resolvable:$true] %s238
          %244 = dma.hbm_to_vmem [thread:$0]  %s237, 4096, %s239, %s228, 128, 128, 8
        $region28: #{tpu_custom_call.1} parent=15 // pred_fallthru
          _
        // Predicated region
        $region29: #{tpu_custom_call.1} parent=15 // pred_check
          %p245 = pneg %p127
        $region30: #{tpu_custom_call.1} parent=15 // pred_check_branch
          %247 = sbr.rel (%p245) target = $region32
        $region31: #{tpu_custom_call.1} parent=15 // pred_region
          %s248 = smul.u32 2, %s24
          %p249 = scmp.lt.s32.totalorder %s248, 3
          %s250 = scalar_select %p249, %s248, 3
          %s251 = scalar_lea.vmem %s3, %s250
          %s252 = smul.u32 2, %s24
        $region32: #{tpu_custom_call.1} parent=15 // pred_fallthru
          _
        // Predicated region
        $region33: #{tpu_custom_call.1} parent=15 // pred_check
          %p253 = pneg %p153
        $region34: #{tpu_custom_call.1} parent=15 // pred_check_branch
          %255 = sbr.rel (%p253) target = $region36
        $region35: #{tpu_custom_call.1} parent=15 // pred_region
          %s256 = smul.u32 4, %s25
          %p257 = scmp.lt.s32.totalorder %s256, 7
          %s258 = scalar_select %p257, %s256, 7
          %s259 = smul.addr %s258, 8
          %s260 = scalar_lea.vmem %s4, %s259
          %s261 = smul.u32 4, %s25
        $region36: #{tpu_custom_call.1} parent=15 // pred_fallthru
          _
      $region16: #{tpu_custom_call.1} parent=5 // pred_fallthru
        _
      %p262 = scmp.le.s32.totalorder 1, %s17
      %p263 = scmp.lt.s32.totalorder %s17, 5
      %p264 = pnand %p262, %p263
      %p265 = pneg %p264
      // Predicated region
      $region37: #{tpu_custom_call.1} parent=5 // pred_check
        _
      $region38: #{tpu_custom_call.1} parent=5 // pred_check_branch
        %267 = sbr.rel (%p264) target = $region40
      $region39: #{tpu_custom_call.1} parent=5 // pred_region
        %s268 = ssub.s32 %s17, 1
        %s269 = sand.u32 %s94, 1
        %s270 = scalar_lea.sflag [#allocation3], %s269
        %s271 = sand.u32 %s94, 1
        %s272 = smul.addr %s271, 256
        %s273 = scalar_lea.vmem [#allocation2], %s272
        // Predicated region
        $region41: #{tpu_custom_call.1} parent=39 // pred_check
          %p274 = pneg %p107
        $region42: #{tpu_custom_call.1} parent=39 // pred_check_branch
          %276 = sbr.rel (%p274) target = $region44
        $region43: #{tpu_custom_call.1} parent=39 // pred_region
          %277 = dma.done %s270, 4096
        $region44: #{tpu_custom_call.1} parent=39 // pred_fallthru
          _
        %s278 = smul.u32 4, %s27
        %p279 = scmp.lt.s32.totalorder %s278, 7
        %s280 = scalar_select %p279, %s278, 7
        %s281 = smul.addr %s280, 8
        %s282 = scalar_lea.vmem %s0, %s281
        %p283 = pneg %p55
        %p284 = pneg %p52
        %s285 = smul.u32 4, %s27
        %p286 = scmp.lt.s32.totalorder %s285, 7
        %s287 = scalar_select %p286, %s285, 7
        %s288 = smul.addr %s287, 8
        %s289 = scalar_lea.vmem %s1, %s288
        %p290 = pneg %p81
        %p291 = pneg %p78
        %s292 = sand.u32 %s94, 1
        %s293 = scalar_lea.sflag [#allocation3], %s292
        %s294 = sand.u32 %s94, 1
        %s295 = smul.addr %s294, 256
        %s296 = scalar_lea.vmem [#allocation2], %s295
        %p297 = pneg %p107
        %p298 = pneg %p104
        %s299 = smul.u32 2, %s26
        %p300 = scmp.lt.s32.totalorder %s299, 3
        %s301 = scalar_select %p300, %s299, 3
        %s302 = scalar_lea.vmem %s3, %s301
        %p303 = pneg %p133
        %p304 = pneg %p130
        %s305 = smul.u32 4, %s27
        %p306 = scmp.lt.s32.totalorder %s305, 7
        %s307 = scalar_select %p306, %s305, 7
        %s308 = smul.addr %s307, 8
        %s309 = scalar_lea.vmem %s4, %s308
        %p310 = pneg %p159
        %p311 = pneg %p156
        %p312 = pneg %p187
        %p313 = pneg %p184
        %s314 = sand.u32 %s174, 1
        %s315 = scalar_lea.sflag [#allocation4], %s314
        %s316 = sand.u32 %s174, 1
        %s317 = smul.addr %s316, 64
        %s318 = scalar_lea.vmem [#allocation5], %s317
        %s319 = smul.u32 4, %s27
        %p320 = scmp.lt.s32.totalorder %s319, 7
        %s321 = scalar_select %p320, %s319, 7
        %s322 = smul.addr %s321, 8
        %s323 = scalar_lea.vmem %s0, %s322
        %s324 = smul.u32 4, %s27
        %s325 = smul.u32 4, %s27
        %p326 = scmp.lt.s32.totalorder %s325, 7
        %s327 = scalar_select %p326, %s325, 7
        %s328 = smul.addr %s327, 8
        %s329 = scalar_lea.vmem %s1, %s328
        %s330 = smul.u32 4, %s27
        %s331 = smul.u32 32, %s26
        %s332 = smul.u32 2, %s26
        %p333 = scmp.lt.s32.totalorder %s332, 3
        %s334 = scalar_select %p333, %s332, 3
        %s335 = scalar_lea.vmem %s3, %s334
        %s336 = smul.u32 2, %s26
        %s337 = smul.u32 4, %s27
        %p338 = scmp.lt.s32.totalorder %s337, 7
        %s339 = scalar_select %p338, %s337, 7
        %s340 = smul.addr %s339, 8
        %s341 = scalar_lea.vmem %s4, %s340
        %s342 = smul.u32 4, %s27
        %s343 = smul.u32 4, %s27
        %s344 = smul.u32 2, %s26
        %v345 = vld [vmem:[%s323] sm:$0xff]
        %v346 = vld [vmem:[%s323 + $0x8] sm:$0xff]
        %v347 = vld [vmem:[%s323 + $0x10] sm:$0xff]
        %v348 = vld [vmem:[%s323 + $0x18] sm:$0xff]
        %v349 = vld [vmem:[%s273] sm:$0xff]
        %v350 = vld [vmem:[%s273 + $0x8] sm:$0xff]
        %v351 = vld [vmem:[%s273 + $0x10] sm:$0xff]
        %v352 = vld [vmem:[%s273 + $0x18] sm:$0xff]
        %v353 = vld [vmem:[%s273 + $0x20] sm:$0xff]
        %v354 = vld [vmem:[%s273 + $0x28] sm:$0xff]
        %v355 = vld [vmem:[%s273 + $0x30] sm:$0xff]
        %v356 = vld [vmem:[%s273 + $0x38] sm:$0xff]
        %v357 = vld [vmem:[%s273 + $0x40] sm:$0xff]
        %v358 = vld [vmem:[%s273 + $0x48] sm:$0xff]
        %v359 = vld [vmem:[%s273 + $0x50] sm:$0xff]
        %v360 = vld [vmem:[%s273 + $0x58] sm:$0xff]
        %v361 = vld [vmem:[%s273 + $0x60] sm:$0xff]
        %v362 = vld [vmem:[%s273 + $0x68] sm:$0xff]
        %v363 = vld [vmem:[%s273 + $0x70] sm:$0xff]
        %v364 = vld [vmem:[%s273 + $0x78] sm:$0xff]
        %v365 = vld [vmem:[%s273 + $0x80] sm:$0xff]
        %v366 = vld [vmem:[%s273 + $0x88] sm:$0xff]
        %v367 = vld [vmem:[%s273 + $0x90] sm:$0xff]
        %v368 = vld [vmem:[%s273 + $0x98] sm:$0xff]
        %v369 = vld [vmem:[%s273 + $0xa0] sm:$0xff]
        %v370 = vld [vmem:[%s273 + $0xa8] sm:$0xff]
        %v371 = vld [vmem:[%s273 + $0xb0] sm:$0xff]
        %v372 = vld [vmem:[%s273 + $0xb8] sm:$0xff]
        %v373 = vld [vmem:[%s273 + $0xc0] sm:$0xff]
        %v374 = vld [vmem:[%s273 + $0xc8] sm:$0xff]
        %v375 = vld [vmem:[%s273 + $0xd0] sm:$0xff]
        %v376 = vld [vmem:[%s273 + $0xd8] sm:$0xff]
        %v377 = vld [vmem:[%s273 + $0xe0] sm:$0xff]
        %v378 = vld [vmem:[%s273 + $0xe8] sm:$0xff]
        %v379 = vld [vmem:[%s273 + $0xf0] sm:$0xff]
        %v380 = vld [vmem:[%s273 + $0xf8] sm:$0xff]
        %381 = vmatprep.subr.mxu0 0.0
        %382 = vmatpush1.xpose.msra.mxu0 %v349
        %383 = vmatprep.subr.mxu0 0.0
        %384 = vmatpush1.xpose.msra.mxu0 %v350
        %385 = vmatprep.subr.mxu0 0.0
        %386 = vmatpush1.xpose.msra.mxu0 %v351
        %387 = vmatprep.subr.mxu0 0.0
        %388 = vmatpush1.xpose.msra.mxu0 %v352
        %389 = vmatprep.subr.mxu0 0.0
        %390 = vmatpush1.xpose.msra.mxu0 %v353
        %391 = vmatprep.subr.mxu0 0.0
        %392 = vmatpush1.xpose.msra.mxu0 %v354
        %393 = vmatprep.subr.mxu0 0.0
        %394 = vmatpush1.xpose.msra.mxu0 %v355
        %395 = vmatprep.subr.mxu0 0.0
        %396 = vmatpush1.xpose.msra.mxu0 %v356
        %397 = vmatprep.subr.mxu0 0.0
        %398 = vmatpush1.xpose.msra.mxu0 %v357
        %399 = vmatprep.subr.mxu0 0.0
        %400 = vmatpush1.xpose.msra.mxu0 %v358
        %401 = vmatprep.subr.mxu0 0.0
        %402 = vmatpush1.xpose.msra.mxu0 %v359
        %403 = vmatprep.subr.mxu0 0.0
        %404 = vmatpush1.xpose.msra.mxu0 %v360
        %405 = vmatprep.subr.mxu0 0.0
        %406 = vmatpush1.xpose.msra.mxu0 %v361
        %407 = vmatprep.subr.mxu0 0.0
        %408 = vmatpush1.xpose.msra.mxu0 %v362
        %409 = vmatprep.subr.mxu0 0.0
        %410 = vmatpush1.xpose.msra.mxu0 %v363
        %411 = vmatprep.subr.mxu0 0.0
        %412 = vmatpush1.xpose.msra.mxu0 %v364
        %413 = vmatprep.subr.mxu0 0.0
        %414 = vmatpush1.xpose.msra.mxu0 %v365
        %415 = vmatprep.subr.mxu0 0.0
        %416 = vmatpush1.xpose.msra.mxu0 %v366
        %417 = vmatprep.subr.mxu0 0.0
        %418 = vmatpush1.xpose.msra.mxu0 %v367
        %419 = vmatprep.subr.mxu0 0.0
        %420 = vmatpush1.xpose.msra.mxu0 %v368
        %421 = vmatprep.subr.mxu0 0.0
        %422 = vmatpush1.xpose.msra.mxu0 %v369
        %423 = vmatprep.subr.mxu0 0.0
        %424 = vmatpush1.xpose.msra.mxu0 %v370
        %425 = vmatprep.subr.mxu0 0.0
        %426 = vmatpush1.xpose.msra.mxu0 %v371
        %427 = vmatprep.subr.mxu0 0.0
        %428 = vmatpush1.xpose.msra.mxu0 %v372
        %429 = vmatprep.subr.mxu0 0.0
        %430 = vmatpush1.xpose.msra.mxu0 %v373
        %431 = vmatprep.subr.mxu0 0.0
        %432 = vmatpush1.xpose.msra.mxu0 %v374
        %433 = vmatprep.subr.mxu0 0.0
        %434 = vmatpush1.xpose.msra.mxu0 %v375
        %435 = vmatprep.subr.mxu0 0.0
        %436 = vmatpush1.xpose.msra.mxu0 %v376
        %437 = vmatprep.subr.mxu0 0.0
        %438 = vmatpush1.xpose.msra.mxu0 %v377
        %439 = vmatprep.subr.mxu0 0.0
        %440 = vmatpush1.xpose.msra.mxu0 %v378
        %441 = vmatprep.subr.mxu0 0.0
        %442 = vmatpush1.xpose.msra.mxu0 %v379
        %443 = vmatprep.subr.mxu0 0.0
        %444 = vmatpush1.xpose.msra.mxu0 %v380
        %445 = vmatprep.mubr.f32.mxu0 0.0
        %446 = vmatmul.mubr.f32.gmra.mrb[0].mxu0 %v345
        %v447 = vpop.f32.mrb[0].mxu0
        %v448 = vadd.f32 0.0, %v447
        %v449 = vpop.f32.mrb[0].mxu0
        %v450 = vadd.f32 0.0, %v449
        %451 = vmatprep.mubr.f32.mxu0 0.0
        %452 = vmatmul.mubr.f32.gmra.mrb[0].mxu0 %v346
        %v453 = vpop.f32.mrb[0].mxu0
        %v454 = vadd.f32 0.0, %v453
        %v455 = vpop.f32.mrb[0].mxu0
        %v456 = vadd.f32 0.0, %v455
        %457 = vmatprep.mubr.f32.mxu0 0.0
        %458 = vmatmul.mubr.f32.gmra.mrb[0].mxu0 %v347
        %v459 = vpop.f32.mrb[0].mxu0
        %v460 = vadd.f32 0.0, %v459
        %v461 = vpop.f32.mrb[0].mxu0
        %v462 = vadd.f32 0.0, %v461
        %463 = vmatprep.mubr.f32.mxu0 0.0
        %464 = vmatmul.mubr.f32.gmra.mrb[0].mxu0 %v348
        %v465 = vpop.f32.mrb[0].mxu0
        %v466 = vadd.f32 0.0, %v465
        %v467 = vpop.f32.mrb[0].mxu0
        %v468 = vadd.f32 0.0, %v467
        %469 = vdwg.mxu0
        %v470 = vld [vmem:[%s329] sm:$0xff]
        %v471 = vld [vmem:[%s329 + $0x8] sm:$0xff]
        %v472 = vld [vmem:[%s329 + $0x10] sm:$0xff]
        %v473 = vld [vmem:[%s329 + $0x18] sm:$0xff]
        %475 = vset.pattern.permute.xlu0 0
        %476 = vperm.xlu0 %475, %v470
        %v477 = vpop.permute.xlu0 %476
        %480 = vset.pattern.permute.xlu0 0
        %481 = vperm.xlu0 %480, %v471
        %v482 = vpop.permute.xlu0 %481
        %485 = vset.pattern.permute.xlu0 0
        %486 = vperm.xlu0 %485, %v472
        %v487 = vpop.permute.xlu0 %486
        %490 = vset.pattern.permute.xlu0 0
        %491 = vperm.xlu0 %490, %v473
        %v492 = vpop.permute.xlu0 %491
        %v494 = vmul.f32 %v448, %v477
        %v495 = vmul.f32 %v450, %v477
        %v496 = vmul.f32 %v454, %v482
        %v497 = vmul.f32 %v456, %v482
        %v498 = vmul.f32 %v460, %v487
        %v499 = vmul.f32 %v462, %v487
        %v500 = vmul.f32 %v466, %v492
        %v501 = vmul.f32 %v468, %v492
        %v502 = vld [vmem:[%s335] sm:$0x3]
        %v504 = vlaneseq
        %v505 = vshrl.u32 %v504, 7
        %v506 = vsub.s32 0, %v505
        %v507 = vrot.slane %v502, %v506
        %v508 = vlaneseq
        %v509 = vshrl.u32 %v508, 7
        %v510 = vsub.s32 1, %v509
        %v511 = vrot.slane %v502, %v510
        %v514 = vmul.f32 %v494, %v507
        %v515 = vmul.f32 %v495, %v511
        %v516 = vmul.f32 %v496, %v507
        %v517 = vmul.f32 %v497, %v511
        %v518 = vmul.f32 %v498, %v507
        %v519 = vmul.f32 %v499, %v511
        %v520 = vmul.f32 %v500, %v507
        %v521 = vmul.f32 %v501, %v511
        %v522 = vsub.f32 1.25, %v514
        %v523 = vsub.f32 1.25, %v515
        %v524 = vsub.f32 1.25, %v516
        %v525 = vsub.f32 1.25, %v517
        %v526 = vsub.f32 1.25, %v518
        %v527 = vsub.f32 1.25, %v519
        %v528 = vsub.f32 1.25, %v520
        %v529 = vsub.f32 1.25, %v521
        %v530 = vmax.f32 %v522, 0.0
        %v531 = vmax.f32 %v523, 0.0
        %v532 = vmax.f32 %v524, 0.0
        %v533 = vmax.f32 %v525, 0.0
        %v534 = vmax.f32 %v526, 0.0
        %v535 = vmax.f32 %v527, 0.0
        %v536 = vmax.f32 %v528, 0.0
        %v537 = vmax.f32 %v529, 0.0
        %v538 = vadd.f32 %v514, 0.25
        %v539 = vadd.f32 %v515, 0.25
        %v540 = vadd.f32 %v516, 0.25
        %v541 = vadd.f32 %v517, 0.25
        %v542 = vadd.f32 %v518, 0.25
        %v543 = vadd.f32 %v519, 0.25
        %v544 = vadd.f32 %v520, 0.25
        %v545 = vadd.f32 %v521, 0.25
        %v546 = vmax.f32 %v538, 0.0
        %v547 = vmax.f32 %v539, 0.0
        %v548 = vmax.f32 %v540, 0.0
        %v549 = vmax.f32 %v541, 0.0
        %v550 = vmax.f32 %v542, 0.0
        %v551 = vmax.f32 %v543, 0.0
        %v552 = vmax.f32 %v544, 0.0
        %v553 = vmax.f32 %v545, 0.0
        %s554 = smul.u32 %s26, 256
        %v555 = vlaneseq
        %v556 = vand.u32 %v555, 127
        %v557 = vadd.s32 %v556, 128
        %v558 = vstv %s554
        %v559 = vadd.s32 %v558, %v556
        %v560 = vadd.s32 %v558, %v557
        %v561 = vld [vmem:[%s341] sm:$0xff]
        %v562 = vld [vmem:[%s341 + $0x8] sm:$0xff]
        %v563 = vld [vmem:[%s341 + $0x10] sm:$0xff]
        %v564 = vld [vmem:[%s341 + $0x18] sm:$0xff]
        %565 = vset.pattern.permute.xlu0 0
        %566 = vperm.xlu0 %565, %v561
        %v567 = vpop.permute.xlu0 %566
        %568 = vset.pattern.permute.xlu0 0
        %569 = vperm.xlu0 %568, %v562
        %v570 = vpop.permute.xlu0 %569
        %571 = vset.pattern.permute.xlu0 0
        %572 = vperm.xlu0 %571, %v563
        %v573 = vpop.permute.xlu0 %572
        %574 = vset.pattern.permute.xlu0 0
        %575 = vperm.xlu0 %574, %v564
        %v576 = vpop.permute.xlu0 %575
        %vm577 = vcmp.eq.s32.totalorder %v559, %v567
        %vm578 = vcmp.eq.s32.totalorder %v560, %v567
        %vm579 = vcmp.eq.s32.totalorder %v559, %v570
        %vm580 = vcmp.eq.s32.totalorder %v560, %v570
        %vm581 = vcmp.eq.s32.totalorder %v559, %v573
        %vm582 = vcmp.eq.s32.totalorder %v560, %v573
        %vm583 = vcmp.eq.s32.totalorder %v559, %v576
        %vm584 = vcmp.eq.s32.totalorder %v560, %v576
        %v585 = vsub.f32 %v514, 0.75
        %v586 = vsub.f32 %v515, 0.75
        %v587 = vsub.f32 %v516, 0.75
        %v588 = vsub.f32 %v517, 0.75
        %v589 = vsub.f32 %v518, 0.75
        %v590 = vsub.f32 %v519, 0.75
        %v591 = vsub.f32 %v520, 0.75
        %v592 = vsub.f32 %v521, 0.75
        %v593 = vmul.f32 %v530, %v585
        %v594 = vmul.f32 %v531, %v586
        %v595 = vmul.f32 %v532, %v587
        %v596 = vmul.f32 %v533, %v588
        %v597 = vmul.f32 %v534, %v589
        %v598 = vmul.f32 %v535, %v590
        %v599 = vmul.f32 %v536, %v591
        %v600 = vmul.f32 %v537, %v592
        %v601 = vsub.f32 %v514, 0.25
        %v602 = vsub.f32 %v515, 0.25
        %v603 = vsub.f32 %v516, 0.25
        %v604 = vsub.f32 %v517, 0.25
        %v605 = vsub.f32 %v518, 0.25
        %v606 = vsub.f32 %v519, 0.25
        %v607 = vsub.f32 %v520, 0.25
        %v608 = vsub.f32 %v521, 0.25
        %v609 = vmul.f32 %v546, %v601
        %v610 = vmul.f32 %v547, %v602
        %v611 = vmul.f32 %v548, %v603
        %v612 = vmul.f32 %v549, %v604
        %v613 = vmul.f32 %v550, %v605
        %v614 = vmul.f32 %v551, %v606
        %v615 = vmul.f32 %v552, %v607
        %v616 = vmul.f32 %v553, %v608
        %v617 = vsel %vm577, %v593, %v609
        %v618 = vsel %vm578, %v594, %v610
        %v619 = vsel %vm579, %v595, %v611
        %v620 = vsel %vm580, %v596, %v612
        %v621 = vsel %vm581, %v597, %v613
        %v622 = vsel %vm582, %v598, %v614
        %v623 = vsel %vm583, %v599, %v615
        %v624 = vsel %vm584, %v600, %v616
        %v625 = vmul.f32 %v617, 256.0
        %v626 = vmul.f32 %v618, 256.0
        %v627 = vmul.f32 %v619, 256.0
        %v628 = vmul.f32 %v620, 256.0
        %v629 = vmul.f32 %v621, 256.0
        %v630 = vmul.f32 %v622, 256.0
        %v631 = vmul.f32 %v623, 256.0
        %v632 = vmul.f32 %v624, 256.0
        %633 = vst [vmem:[%s318] sm:$0xff] %v625
        %634 = vst [vmem:[%s318 + $0x8] sm:$0xff] %v626
        %635 = vst [vmem:[%s318 + $0x10] sm:$0xff] %v627
        %636 = vst [vmem:[%s318 + $0x18] sm:$0xff] %v628
        %637 = vst [vmem:[%s318 + $0x20] sm:$0xff] %v629
        %638 = vst [vmem:[%s318 + $0x28] sm:$0xff] %v630
        %639 = vst [vmem:[%s318 + $0x30] sm:$0xff] %v631
        %640 = vst [vmem:[%s318 + $0x38] sm:$0xff] %v632
        %s641 = sand.u32 %s174, 1
        %s642 = scalar_lea.sflag [#allocation4], %s641
        %s643 = sand.u32 %s174, 1
        %s644 = smul.addr %s643, 64
        %s645 = scalar_lea.vmem [#allocation5], %s644
        // Predicated region
        $region45: #{tpu_custom_call.1} parent=39 // pred_check
          %p646 = pneg %p184
        $region46: #{tpu_custom_call.1} parent=39 // pred_check_branch
          %648 = sbr.rel (%p646) target = $region48
        $region47: #{tpu_custom_call.1} parent=39 // pred_region
          %s649 = smul.u32 4, %s27
          %s650 = smul.u32 2, %s26
          %s652 = ssub.s32 1024, 1024
          %653 = vsyncadd %s642, %s652
          %s654 = smul.addr %s649, 4
          %s655 = sadd.s32 %s650, %s654
          %s656 = smul.addr %s655, 128
          %s657 = scalar_lea.hbm %s5, %s656
          %s658 = sshll.u32 %s645, 4
          %s659 = int_to_ptr.vmem [resolvable:$true] %s658
          %664 = dma.vmem_to_hbm [thread:$0]  %s659, 1024, %s657, %s642, 256, 512, 16
        $region48: #{tpu_custom_call.1} parent=39 // pred_fallthru
          _
      $region40: #{tpu_custom_call.1} parent=5 // pred_fallthru
        _
      %p665 = scmp.le.s32.totalorder 2, %s17
      // Predicated region
      $region49: #{tpu_custom_call.1} parent=5 // pred_check
        %p666 = pneg %p665
      $region50: #{tpu_custom_call.1} parent=5 // pred_check_branch
        %668 = sbr.rel (%p666) target = $region52
      $region51: #{tpu_custom_call.1} parent=5 // pred_region
        %s669 = ssub.s32 %s17, 2
        // Predicated region
        $region53: #{tpu_custom_call.1} parent=51 // pred_check
          %p670 = pneg %p190
        $region54: #{tpu_custom_call.1} parent=51 // pred_check_branch
          %672 = sbr.rel (%p670) target = $region56
        $region55: #{tpu_custom_call.1} parent=51 // pred_region
          %s673 = sand.u32 %s175, 1
          %s674 = scalar_lea.sflag [#allocation4], %s673
          %s675 = sand.u32 %s175, 1
          %s676 = smul.addr %s675, 64
          %s677 = scalar_lea.vmem [#allocation5], %s676
          %678 = dma.done %s674, 1024
        $region56: #{tpu_custom_call.1} parent=51 // pred_fallthru
          _
      $region52: #{tpu_custom_call.1} parent=5 // pred_fallthru
        _
    $region6: #{tpu_custom_call.1} parent=1 // loop_footer
      %s21 = sadd.s32 1, %s17
    $region7: #{tpu_custom_call.1} parent=1 // loop_footer_branch
      %16 = sbr.rel target = $region3
    $region8: #{tpu_custom_call.1} parent=1 // loop_exit
      _
    %679 = vsyncpa [#allocation3], 1
    %s680 = scalar_lea.sflag [#allocation3], 1
    %681 = vsyncpa %s680, 1
    %682 = vsyncpa [#allocation4], 1
    %s683 = scalar_lea.sflag [#allocation4], 1
    %684 = vsyncpa %s683, 1

</llo_original>
